<compile_context>
chip_gen: v5e
topology: v5e:2x2
jax: 0.10.0
libtpu: 0.0.40
codegen_flags: <defaults>
</compile_context>

<pallas_src>
import functools

import jax
import jax.numpy as jnp
import numpy as np
from jax.experimental import pallas as pl
from jax.experimental.pallas import tpu as pltpu

LN_EPS = 1e-5  # PyTorch nn.LayerNorm default


def _round_up(n, m):
    return (n + m - 1) // m * m


def _layernorm(h, inv_c, gamma, beta):
    # Biased variance over the channel axis, exactly like torch.nn.LayerNorm.
    mu = jnp.sum(h, axis=-1, keepdims=True) * inv_c
    centered = h - mu
    var = jnp.sum(centered * centered, axis=-1, keepdims=True) * inv_c
    return centered * jax.lax.rsqrt(var + LN_EPS) * gamma + beta


def mlp_encoder_kernel(x_ref, vecs_ref, w1_ref, bb1_ref, w2_ref, o_ref, *,
                       inv_c, mxu_dtype):
    x = x_ref[...].astype(jnp.float32)          # (TM, C)

    vecs = vecs_ref[...]                        # (8, C) packed per-channel constants
    gate1 = vecs[0:1, :]                        # 1 + sigmoid-gate (residual folded in)
    g1, b1 = vecs[1:2, :], vecs[2:3, :]         # LayerNorm1 gamma/beta
    bb2 = vecs[3:4, :]                          # ff second bias
    g2, b2 = vecs[4:5, :], vecs[5:6, :]         # LayerNorm2 gamma/beta

    # x = attention(x) + x  ==  x * (1 + gate)
    h = x * gate1

    # x = LayerNorm1(x)
    h1 = _layernorm(h, inv_c, g1, b1)

    # x = feedforward(x) + x  ==  2*x + Linear2(silu(Linear1(x)))
    # MXU matmuls in bf16 with f32 accumulation; elementwise stays f32 on the VPU.
    z = jnp.dot(h1.astype(mxu_dtype), w1_ref[...],
                preferred_element_type=jnp.float32) + bb1_ref[...]
    z = z * jax.nn.sigmoid(z)                   # SiLU
    ff = jnp.dot(z.astype(mxu_dtype), w2_ref[...],
                 preferred_element_type=jnp.float32) + bb2
    h2 = 2.0 * h1 + ff

    # x = LayerNorm2(x)
    o_ref[...] = _layernorm(h2, inv_c, g2, b2).astype(o_ref.dtype)


def _const_spec(shape, single_buffer):
    idx = lambda i: (0, 0)
    if single_buffer and hasattr(pl, "Buffered"):
        try:
            # Block index never changes -> one resident buffer is enough.
            return pl.BlockSpec(shape, idx, pipeline_mode=pl.Buffered(1))
        except TypeError:
            pass  # older jax without pipeline_mode: fall back to default buffering
    return pl.BlockSpec(shape, idx)


@functools.partial(jax.jit,
                   static_argnames=("tile_m", "mxu_dtype", "io_dtype",
                                    "single_buffer_consts"))
def mlp_encoder_layer(x, params, tile_m=512, mxu_dtype=jnp.bfloat16,
                      io_dtype=None, single_buffer_consts=True):
    """x: (B, N, C). params: dict of module parameters (see make_params)."""
    B, N, C = x.shape
    H = params["ff_w1"].shape[0]                     # C // shunkrate
    Hp = _round_up(H, 128)                           # lane-dense hidden dim (kernel-internal)
    rows = B * N

    # ---- HBM I/O: plain reshape, no padding / copies ----
    x2 = x.reshape(rows, C)
    if io_dtype is not None:
        x2 = x2.astype(io_dtype)
    out_dtype = x2.dtype
    in_b = jnp.dtype(x2.dtype).itemsize
    out_b = jnp.dtype(out_dtype).itemsize
    w_bytes = jnp.dtype(mxu_dtype).itemsize

    # ---- generation-aware VMEM budget & megacore heuristic ----
    try:
        vmem_cap = int(pltpu.get_tpu_info().vmem_capacity_bytes)
    except Exception:
        vmem_cap = 128 << 20                         # v5e/v6e default
    budget = int(0.75 * vmem_cap)                    # ~96 MiB v5e/v6e, ~48 MiB/TC v7x
    multi_tc = vmem_cap < (100 << 20)                # v7x: 64 MiB per TC, 2 TCs/chip

    # ---- row tile selection ----
    tile = _round_up(min(tile_m, _round_up(rows, 8)), 8)
    if multi_tc and rows > 8:
        # Guarantee >= 2 grid steps so ("parallel",) can use both TensorCores.
        tile = min(tile, _round_up(pl.cdiv(rows, 2), 8))

    n_cb = 1 if single_buffer_consts else 2

    def vmem_estimate(t):
        io = 2 * t * C * (in_b + out_b)                              # x & out, double-buffered
        consts = n_cb * (2 * C * Hp * w_bytes + 8 * C * 4 + 8 * Hp * 4)
        interm = t * (4 * C + 2 * Hp) * 4 + t * (C + Hp) * w_bytes   # f32 temps + bf16 copies
        return io + consts + interm

    while vmem_estimate(tile) > budget and tile > 8:
        if tile > 64:
            tile = max(8, _round_up(tile - 64, 8))   # fine-grained shrink near the budget
        else:
            tile = max(8, _round_up(tile // 2, 8))

    grid = (pl.cdiv(rows, tile),)                    # partial last block is masked by Pallas
    vmem_limit = int(min(vmem_cap - (4 << 20),
                         max(vmem_estimate(tile) + (16 << 20), 32 << 20)))

    # ---- AttentionLayer gate: x-independent, computed once outside the kernel ----
    s = params["s_embed"]                            # (1, C)  == Embedding(key=0)
    e1 = s @ params["att_w1"].T                      # (1, H)
    e1 = e1 * jax.nn.sigmoid(e1)                     # SiLU
    gate = jax.nn.sigmoid(e1 @ params["att_w2"].T)   # (1, C)

    # ---- packed per-channel constants: one (8, C) operand ----
    zc = jnp.zeros((1, C), jnp.float32)
    vecs = jnp.concatenate([
        (1.0 + gate).astype(jnp.float32),            # residual "+x" folded into the gate
        params["ln1_g"].reshape(1, C).astype(jnp.float32),
        params["ln1_b"].reshape(1, C).astype(jnp.float32),
        params["ff_b2"].reshape(1, C).astype(jnp.float32),
        params["ln2_g"].reshape(1, C).astype(jnp.float32),
        params["ln2_b"].reshape(1, C).astype(jnp.float32),
        zc, zc,
    ], axis=0)                                       # (8, C)

    # ---- FFN weights (tiny: pad H -> Hp for lane-dense internal matmuls) ----
    w1t = jnp.pad(params["ff_w1"].T, ((0, 0), (0, Hp - H))).astype(mxu_dtype)   # (C, Hp)
    bb1 = jnp.pad(params["ff_b1"].reshape(1, H),
                  ((0, 0), (0, Hp - H))).astype(jnp.float32)                    # (1, Hp)
    w2t = jnp.pad(params["ff_w2"].T, ((0, Hp - H), (0, 0))).astype(mxu_dtype)   # (Hp, C)

    row_spec = pl.BlockSpec((tile, C), lambda i: (i, 0))
    cs = lambda shape: _const_spec(shape, single_buffer_consts)

    cost = pl.CostEstimate(
        flops=int(rows * (4 * C * Hp + 24 * C)),
        transcendentals=int(rows * (Hp + 4)),
        bytes_accessed=int(rows * C * (in_b + out_b)
                           + 2 * C * Hp * w_bytes + (8 * C + 8 * Hp) * 4),
    )

    kernel = functools.partial(mlp_encoder_kernel,
                               inv_c=float(1.0 / C), mxu_dtype=mxu_dtype)

    out = pl.pallas_call(
        kernel,
        out_shape=jax.ShapeDtypeStruct((rows, C), out_dtype),
        grid_spec=pltpu.PrefetchScalarGridSpec(
            num_scalar_prefetch=0,
            grid=grid,
            in_specs=[
                row_spec,            # x tile (rows)
                cs((8, C)),          # packed per-channel vectors
                cs((C, Hp)),         # ff W1^T (mxu dtype)
                cs((1, Hp)),         # ff b1
                cs((Hp, C)),         # ff W2^T (mxu dtype)
            ],
            out_specs=row_spec,
        ),
        compiler_params=pltpu.CompilerParams(
            dimension_semantics=("parallel",),
            vmem_limit_bytes=vmem_limit,
        ),
        cost_estimate=cost,
    )(x2, vecs, w1t, bb1, w2t)

    return out.reshape(B, N, C)


def make_params(channel, shunkrate, key):
    """Deterministic parameter init matching the module's shapes."""
    h = channel // shunkrate
    ks = jax.random.split(key, 8)
    return {
        # AttentionLayer
        "s_embed": jax.random.normal(ks[0], (1, channel), jnp.float32),
        "att_w1": jax.random.normal(ks[1], (h, channel), jnp.float32) * 0.2,
        "att_w2": jax.random.normal(ks[2], (channel, h), jnp.float32) * 0.2,
        # LayerNorms
        "ln1_g": jnp.ones((channel,), jnp.float32),
        "ln1_b": jnp.zeros((channel,), jnp.float32),
        "ln2_g": jnp.ones((channel,), jnp.float32),
        "ln2_b": jnp.zeros((channel,), jnp.float32),
        # CSPLayer bottleneck
        "ff_w1": jax.random.normal(ks[3], (h, channel), jnp.float32) * 0.2,
        "ff_b1": jax.random.normal(ks[4], (h,), jnp.float32) * 0.1,
        "ff_w2": jax.random.normal(ks[5], (channel, h), jnp.float32) * 0.2,
        "ff_b2": jax.random.normal(ks[6], (channel,), jnp.float32) * 0.1,
    }


def _ref_layernorm(h, gamma, beta):
    mu = jnp.mean(h, axis=-1, keepdims=True)
    var = jnp.mean((h - mu) * (h - mu), axis=-1, keepdims=True)
    return (h - mu) * jax.lax.rsqrt(var + LN_EPS) * gamma + beta


def reference_forward(x, params, mxu_dtype=None):
    """Pure-JAX reference mirroring the PyTorch module.

    If mxu_dtype is given, the two FFN matmuls cast their operands the same way the
    kernel does (bf16 operands, f32 accumulation); otherwise pure f32.
    """
    s = params["s_embed"]
    e1 = s @ params["att_w1"].T
    e1 = e1 * jax.nn.sigmoid(e1)
    gate = jax.nn.sigmoid(e1 @ params["att_w2"].T)           # (1, C)

    h = x * gate + x                                         # attention(x) + x
    h = _ref_layernorm(h, params["ln1_g"], params["ln1_b"])  # LN1

    w1, w2 = params["ff_w1"].T, params["ff_w2"].T
    hi = h
    if mxu_dtype is not None:
        hi, w1 = h.astype(mxu_dtype), w1.astype(mxu_dtype)
    z = jnp.dot(hi, w1, preferred_element_type=jnp.float32) + params["ff_b1"]
    z = z * jax.nn.sigmoid(z)
    zi = z
    if mxu_dtype is not None:
        zi, w2 = z.astype(mxu_dtype), w2.astype(mxu_dtype)
    ff = jnp.dot(zi, w2, preferred_element_type=jnp.float32) + params["ff_b2"]

    h = (h + ff) + h                                         # feedforward(h) + h
    return _ref_layernorm(h, params["ln2_g"], params["ln2_b"])


if __name__ == "__main__":
    key = jax.random.PRNGKey(0)
    kx, kp, kx2 = jax.random.split(key, 3)

    B, N, C, R = 2, 8, 32, 4
    params = make_params(C, R, kp)
    x = jax.random.normal(kx, (B, N, C), jnp.float32)

    out = jax.block_until_ready(mlp_encoder_layer(x, params))

    # Tight check against a reference with identical (bf16-MXU, f32-accum) matmul math.
    ref_match = reference_forward(x, params, mxu_dtype=jnp.bfloat16)
    np.testing.assert_allclose(np.asarray(out), np.asarray(ref_match),
                               rtol=1e-4, atol=1e-4)
    # Looser sanity check against the exact-f32 PyTorch-module semantics.
    ref_f32 = reference_forward(x, params)
    np.testing.assert_allclose(np.asarray(out), np.asarray(ref_f32),
                               rtol=5e-2, atol=5e-2)

    # Ragged row count (rows not a multiple of the tile): exercises the masked partial
    # last output block produced by grid = pl.cdiv(rows, tile).
    x_ragged = jax.random.normal(kx2, (2, 9, C), jnp.float32)
    out_ragged = jax.block_until_ready(mlp_encoder_layer(x_ragged, params))
    ref_ragged = reference_forward(x_ragged, params, mxu_dtype=jnp.bfloat16)
    np.testing.assert_allclose(np.asarray(out_ragged), np.asarray(ref_ragged),
                               rtol=1e-4, atol=1e-4)

    print("KERNEL_OK")
</pallas_src>

<mosaic_0001>
module attributes {stable_mosaic.version = 11 : i64} {
  func.func @mlp_encoder_kernel(%arg0: i32, %arg1: memref<16x32xf32, #tpu.memory_space<vmem>>, %arg2: memref<8x32xf32, #tpu.memory_space<vmem>>, %arg3: memref<32x128xbf16, #tpu.memory_space<vmem>>, %arg4: memref<1x128xf32, #tpu.memory_space<vmem>>, %arg5: memref<128x32xbf16, #tpu.memory_space<vmem>>, %arg6: memref<16x32xf32, #tpu.memory_space<vmem>>) attributes {dimension_semantics = [#tpu.dimension_semantics<parallel>], iteration_bounds = array<i64: 1>, scalar_prefetch = 0 : i64, scratch_operands = 0 : i64, tpu.core_type = #tpu.core_type<tc>, window_params = [{transform_indices = @transform_0, window_bounds = array<i64: 16, 32>}, {pipeline_mode = #tpu.pipeline_mode<synchronous>, transform_indices = @transform_1, window_bounds = array<i64: 8, 32>}, {pipeline_mode = #tpu.pipeline_mode<synchronous>, transform_indices = @transform_2, window_bounds = array<i64: 32, 128>}, {pipeline_mode = #tpu.pipeline_mode<synchronous>, transform_indices = @transform_3, window_bounds = array<i64: 1, 128>}, {pipeline_mode = #tpu.pipeline_mode<synchronous>, transform_indices = @transform_4, window_bounds = array<i64: 128, 32>}, {transform_indices = @transform_5, window_bounds = array<i64: 16, 32>}]} {
    %c0 = arith.constant 0 : index
    %c0_0 = arith.constant 0 : index
    %0 = vector.load %arg1[%c0, %c0_0] : memref<16x32xf32, #tpu.memory_space<vmem>>, vector<16x32xf32>
    %c0_1 = arith.constant 0 : index
    %c0_2 = arith.constant 0 : index
    %1 = vector.load %arg2[%c0_1, %c0_2] : memref<8x32xf32, #tpu.memory_space<vmem>>, vector<8x32xf32>
    %2 = vector.extract_strided_slice %1 {offsets = [0, 0], sizes = [1, 32], strides = [1, 1]} : vector<8x32xf32> to vector<1x32xf32>
    %3 = vector.extract_strided_slice %1 {offsets = [1, 0], sizes = [1, 32], strides = [1, 1]} : vector<8x32xf32> to vector<1x32xf32>
    %4 = vector.extract_strided_slice %1 {offsets = [2, 0], sizes = [1, 32], strides = [1, 1]} : vector<8x32xf32> to vector<1x32xf32>
    %5 = vector.extract_strided_slice %1 {offsets = [3, 0], sizes = [1, 32], strides = [1, 1]} : vector<8x32xf32> to vector<1x32xf32>
    %6 = vector.extract_strided_slice %1 {offsets = [4, 0], sizes = [1, 32], strides = [1, 1]} : vector<8x32xf32> to vector<1x32xf32>
    %7 = vector.extract_strided_slice %1 {offsets = [5, 0], sizes = [1, 32], strides = [1, 1]} : vector<8x32xf32> to vector<1x32xf32>
    %8 = vector.broadcast %2 : vector<1x32xf32> to vector<16x32xf32>
    %9 = arith.mulf %0, %8 : vector<16x32xf32>
    %cst = arith.constant dense<0.000000e+00> : vector<16xf32>
    %10 = vector.multi_reduction <add>, %9, %cst [1] : vector<16x32xf32> to vector<16xf32>
    %11 = vector.shape_cast %10 : vector<16xf32> to vector<16x1xf32>
    %cst_3 = arith.constant 3.125000e-02 : f32
    %12 = vector.broadcast %cst_3 : f32 to vector<16x1xf32>
    %13 = arith.mulf %11, %12 : vector<16x1xf32>
    %14 = vector.broadcast %13 : vector<16x1xf32> to vector<16x32xf32>
    %15 = arith.subf %9, %14 : vector<16x32xf32>
    %16 = arith.mulf %15, %15 : vector<16x32xf32>
    %cst_4 = arith.constant dense<0.000000e+00> : vector<16xf32>
    %17 = vector.multi_reduction <add>, %16, %cst_4 [1] : vector<16x32xf32> to vector<16xf32>
    %18 = vector.shape_cast %17 : vector<16xf32> to vector<16x1xf32>
    %cst_5 = arith.constant 3.125000e-02 : f32
    %19 = vector.broadcast %cst_5 : f32 to vector<16x1xf32>
    %20 = arith.mulf %18, %19 : vector<16x1xf32>
    %cst_6 = arith.constant 9.99999974E-6 : f32
    %21 = vector.broadcast %cst_6 : f32 to vector<16x1xf32>
    %22 = arith.addf %20, %21 : vector<16x1xf32>
    %23 = math.rsqrt %22 : vector<16x1xf32>
    %24 = vector.broadcast %23 : vector<16x1xf32> to vector<16x32xf32>
    %25 = arith.mulf %15, %24 : vector<16x32xf32>
    %26 = vector.broadcast %3 : vector<1x32xf32> to vector<16x32xf32>
    %27 = arith.mulf %25, %26 : vector<16x32xf32>
    %28 = vector.broadcast %4 : vector<1x32xf32> to vector<16x32xf32>
    %29 = arith.addf %27, %28 : vector<16x32xf32>
    %30 = arith.truncf %29 : vector<16x32xf32> to vector<16x32xbf16>
    %c0_7 = arith.constant 0 : index
    %c0_8 = arith.constant 0 : index
    %31 = vector.load %arg3[%c0_7, %c0_8] : memref<32x128xbf16, #tpu.memory_space<vmem>>, vector<32x128xbf16>
    %cst_9 = arith.constant dense<0.000000e+00> : vector<16x128xf32>
    %32 = tpu.matmul %30, %31, %cst_9 {dimension_numbers = #tpu.dot_dimension_numbers<[1], [0], [0], [1], [0, 0, 1, 1], [], []>} : vector<16x32xbf16>, vector<32x128xbf16>, vector<16x128xf32> -> vector<16x128xf32>
    %c0_10 = arith.constant 0 : index
    %c0_11 = arith.constant 0 : index
    %33 = vector.load %arg4[%c0_10, %c0_11] : memref<1x128xf32, #tpu.memory_space<vmem>>, vector<1x128xf32>
    %34 = vector.broadcast %33 : vector<1x128xf32> to vector<16x128xf32>
    %35 = arith.addf %32, %34 : vector<16x128xf32>
    %36 = arith.negf %35 : vector<16x128xf32>
    %37 = math.exp %36 : vector<16x128xf32>
    %cst_12 = arith.constant 1.000000e+00 : f32
    %38 = vector.broadcast %cst_12 : f32 to vector<16x128xf32>
    %39 = arith.addf %38, %37 : vector<16x128xf32>
    %40 = arith.divf %38, %39 : vector<16x128xf32>
    %41 = arith.mulf %35, %40 : vector<16x128xf32>
    %42 = arith.truncf %41 : vector<16x128xf32> to vector<16x128xbf16>
    %c0_13 = arith.constant 0 : index
    %c0_14 = arith.constant 0 : index
    %43 = vector.load %arg5[%c0_13, %c0_14] : memref<128x32xbf16, #tpu.memory_space<vmem>>, vector<128x32xbf16>
    %cst_15 = arith.constant dense<0.000000e+00> : vector<16x32xf32>
    %44 = tpu.matmul %42, %43, %cst_15 {dimension_numbers = #tpu.dot_dimension_numbers<[1], [0], [0], [1], [0, 0, 1, 1], [], []>} : vector<16x128xbf16>, vector<128x32xbf16>, vector<16x32xf32> -> vector<16x32xf32>
    %45 = vector.broadcast %5 : vector<1x32xf32> to vector<16x32xf32>
    %46 = arith.addf %44, %45 : vector<16x32xf32>
    %cst_16 = arith.constant 2.000000e+00 : f32
    %47 = vector.broadcast %cst_16 : f32 to vector<16x32xf32>
    %48 = arith.mulf %47, %29 : vector<16x32xf32>
    %49 = arith.addf %48, %46 : vector<16x32xf32>
    %cst_17 = arith.constant dense<0.000000e+00> : vector<16xf32>
    %50 = vector.multi_reduction <add>, %49, %cst_17 [1] : vector<16x32xf32> to vector<16xf32>
    %51 = vector.shape_cast %50 : vector<16xf32> to vector<16x1xf32>
    %cst_18 = arith.constant 3.125000e-02 : f32
    %52 = vector.broadcast %cst_18 : f32 to vector<16x1xf32>
    %53 = arith.mulf %51, %52 : vector<16x1xf32>
    %54 = vector.broadcast %53 : vector<16x1xf32> to vector<16x32xf32>
    %55 = arith.subf %49, %54 : vector<16x32xf32>
    %56 = arith.mulf %55, %55 : vector<16x32xf32>
    %cst_19 = arith.constant dense<0.000000e+00> : vector<16xf32>
    %57 = vector.multi_reduction <add>, %56, %cst_19 [1] : vector<16x32xf32> to vector<16xf32>
    %58 = vector.shape_cast %57 : vector<16xf32> to vector<16x1xf32>
    %cst_20 = arith.constant 3.125000e-02 : f32
    %59 = vector.broadcast %cst_20 : f32 to vector<16x1xf32>
    %60 = arith.mulf %58, %59 : vector<16x1xf32>
    %cst_21 = arith.constant 9.99999974E-6 : f32
    %61 = vector.broadcast %cst_21 : f32 to vector<16x1xf32>
    %62 = arith.addf %60, %61 : vector<16x1xf32>
    %63 = math.rsqrt %62 : vector<16x1xf32>
    %64 = vector.broadcast %63 : vector<16x1xf32> to vector<16x32xf32>
    %65 = arith.mulf %55, %64 : vector<16x32xf32>
    %66 = vector.broadcast %6 : vector<1x32xf32> to vector<16x32xf32>
    %67 = arith.mulf %65, %66 : vector<16x32xf32>
    %68 = vector.broadcast %7 : vector<1x32xf32> to vector<16x32xf32>
    %69 = arith.addf %67, %68 : vector<16x32xf32>
    %c0_22 = arith.constant 0 : index
    %c0_23 = arith.constant 0 : index
    %70 = vector.load %arg6[%c0_22, %c0_23] : memref<16x32xf32, #tpu.memory_space<vmem>>, vector<16x32xf32>
    tpu.vector_store %arg6[%c0_22, %c0_23], %69 {strides = array<i32>} : memref<16x32xf32, #tpu.memory_space<vmem>>, vector<16x32xf32>,
    return
  }
  func.func @transform_0(%arg0: i32) -> (i32, i32) {
    %c0_i32 = arith.constant 0 : i32
    %c0_i32_0 = arith.constant 0 : i32
    return %arg0, %c0_i32 : i32, i32
  }
  func.func @transform_1(%arg0: i32) -> (i32, i32) {
    %c0_i32 = arith.constant 0 : i32
    %c0_i32_0 = arith.constant 0 : i32
    %c0_i32_1 = arith.constant 0 : i32
    return %c0_i32, %c0_i32_0 : i32, i32
  }
  func.func @transform_2(%arg0: i32) -> (i32, i32) {
    %c0_i32 = arith.constant 0 : i32
    %c0_i32_0 = arith.constant 0 : i32
    %c0_i32_1 = arith.constant 0 : i32
    return %c0_i32, %c0_i32_0 : i32, i32
  }
  func.func @transform_3(%arg0: i32) -> (i32, i32) {
    %c0_i32 = arith.constant 0 : i32
    %c0_i32_0 = arith.constant 0 : i32
    %c0_i32_1 = arith.constant 0 : i32
    return %c0_i32, %c0_i32_0 : i32, i32
  }
  func.func @transform_4(%arg0: i32) -> (i32, i32) {
    %c0_i32 = arith.constant 0 : i32
    %c0_i32_0 = arith.constant 0 : i32
    %c0_i32_1 = arith.constant 0 : i32
    return %c0_i32, %c0_i32_0 : i32, i32
  }
  func.func @transform_5(%arg0: i32) -> (i32, i32) {
    %c0_i32 = arith.constant 0 : i32
    %c0_i32_0 = arith.constant 0 : i32
    return %arg0, %c0_i32 : i32, i32
  }
}

</mosaic_0001>

<llo_original>
// kernel: mlp_encoder_layer.1
$region0: #{mlp_encoder_layer.1}
  #allocation0 [shape = 'u32[]', space=smem, size = 0x4, offset = 0x4, fixed_abs, tag = 'smem constant byte address 0x4 - core index']
  #allocation1 [shape = 'u32[72,128]{1,0:T(1,128)}', space=vmem, size = 0x9000, scoped, tag = 'internal scratch']
  %s0 = inlined_call_operand.vmem [shape: f32[16,32], index: 0, kind: input, shape index: {}]
  %s1 = inlined_call_operand.vmem [shape: f32[8,32], index: 1, kind: input, shape index: {}]
  %s2 = inlined_call_operand.vmem [shape: bf16[32,128], index: 2, kind: input, shape index: {}]
  %s3 = inlined_call_operand.vmem [shape: f32[1,128], index: 3, kind: input, shape index: {}]
  %s4 = inlined_call_operand.vmem [shape: bf16[128,32], index: 4, kind: input, shape index: {}]
  %s5 = inlined_call_operand.hbm [shape: f32[16,32], index: 5, kind: output, shape index: {}]
  %s6 = sld [smem:[#allocation0]]
  $region30: #{mlp_encoder_layer.1} parent=0
    _
  %s8 = ssub.s32 1, %s6
  %s9 = scalar_select 0, %s8, %s6
  $region1: #{mlp_encoder_layer.1} parent=0
    #allocation2 [shape = 'u8[8192]{0}', space=vmem, size = 0x2000, scoped, tag = 'output window, operand 0, single buffered']
    #allocation3 [shape = 's32[1]{0}', space=sflag, size = 0x4, scoped, tag = 'scoped memory for mlp_encoder_layer.1']
    %10 = vsyncpa [#allocation3], 0
    // Predicated region
    $region2: #{mlp_encoder_layer.1} parent=1 // pred_check
      _
    $region3: #{mlp_encoder_layer.1} parent=1 // pred_check_branch
      %12 = sbr.rel (0) target = $region5
    $region4: #{mlp_encoder_layer.1} parent=1 // pred_region
      _
    $region5: #{mlp_encoder_layer.1} parent=1 // pred_fallthru
      _
    // Predicated region
    $region6: #{mlp_encoder_layer.1} parent=1 // pred_check
      _
    $region7: #{mlp_encoder_layer.1} parent=1 // pred_check_branch
      %14 = sbr.rel (0) target = $region9
    $region8: #{mlp_encoder_layer.1} parent=1 // pred_region
      _
    $region9: #{mlp_encoder_layer.1} parent=1 // pred_fallthru
      _
    // Predicated region
    $region10: #{mlp_encoder_layer.1} parent=1 // pred_check
      _
    $region11: #{mlp_encoder_layer.1} parent=1 // pred_check_branch
      %16 = sbr.rel (0) target = $region13
    $region12: #{mlp_encoder_layer.1} parent=1 // pred_region
      _
    $region13: #{mlp_encoder_layer.1} parent=1 // pred_fallthru
      _
    // Predicated region
    $region14: #{mlp_encoder_layer.1} parent=1 // pred_check
      _
    $region15: #{mlp_encoder_layer.1} parent=1 // pred_check_branch
      %18 = sbr.rel (0) target = $region17
    $region16: #{mlp_encoder_layer.1} parent=1 // pred_region
      _
    $region17: #{mlp_encoder_layer.1} parent=1 // pred_fallthru
      _
    // Predicated region
    $region18: #{mlp_encoder_layer.1} parent=1 // pred_check
      _
    $region19: #{mlp_encoder_layer.1} parent=1 // pred_check_branch
      %20 = sbr.rel (0) target = $region21
    $region20: #{mlp_encoder_layer.1} parent=1 // pred_region
      _
    $region21: #{mlp_encoder_layer.1} parent=1 // pred_fallthru
      _
    %v22 = vld [vmem:[%s0] sm:$0xff]
    %v23 = vld [vmem:[%s0 + $0x8] sm:$0xff]
    %v24 = vld [vmem:[%s1] sm:$0xff]
    %v25 = vperm.slane %v24, 0
    %v26 = vmul.f32 %v22, %v25
    %v27 = vmul.f32 %v23, %v25
    %vm28 = vcmask 261120
    %v29 = vsel %vm28, %v26, 0.0
    %30 = vadd.xlane.f32.xlu0 %v29
    %v31 = vpop.xlane.xlu0 %30
    %v32 = vsel %vm28, %v27, 0.0
    %33 = vadd.xlane.f32.xlu0 %v32
    %v34 = vpop.xlane.xlu0 %33
    %v35 = vmul.f32 %v31, 0.03125
    %v36 = vmul.f32 %v34, 0.03125
    %v37 = vsub.f32 %v26, %v35
    %v38 = vsub.f32 %v27, %v36
    %v39 = vmul.f32 %v37, %v37
    %v40 = vmul.f32 %v38, %v38
    %v41 = vsel %vm28, %v39, 0.0
    %42 = vadd.xlane.f32.xlu0 %v41
    %v43 = vpop.xlane.xlu0 %42
    %v44 = vsel %vm28, %v40, 0.0
    %45 = vadd.xlane.f32.xlu0 %v44
    %v46 = vpop.xlane.xlu0 %45
    %v47 = vmul.f32 %v43, 0.03125
    %v48 = vmul.f32 %v46, 0.03125
    %v49 = vadd.f32 %v47, 1e-05
    %v50 = vadd.f32 %v48, 1e-05
    %v51 = vrsqrt.pop %v49
    %v52 = vmul.f32 %v51, %v49
    %v53 = vmul.f32 %v52, %v51
    %v54 = vmul.f32 0.5, %v53
    %v55 = vsub.f32 1.5, %v54
    %v56 = vmul.f32 %v51, %v55
    %vm57 = vweird.f32 %v49
    %vm58 = vweird.f32 %v51
    %vm59 = vmor %vm57, %vm58
    %v60 = vsel %vm59, %v51, %v56
    %v61 = vrsqrt.pop %v50
    %v62 = vmul.f32 %v61, %v50
    %v63 = vmul.f32 %v62, %v61
    %v64 = vmul.f32 0.5, %v63
    %v65 = vsub.f32 1.5, %v64
    %v66 = vmul.f32 %v61, %v65
    %vm67 = vweird.f32 %v50
    %vm68 = vweird.f32 %v61
    %vm69 = vmor %vm67, %vm68
    %v70 = vsel %vm69, %v61, %v66
    %v71 = vmul.f32 %v37, %v60
    %v72 = vmul.f32 %v38, %v70
    %v73 = vperm.slane %v24, 1
    %v74 = vmul.f32 %v71, %v73
    %v75 = vmul.f32 %v72, %v73
    %v76 = vperm.slane %v24, 2
    %v77 = vadd.f32 %v74, %v76
    %v78 = vadd.f32 %v75, %v76
    %v79 = vpack.c.bf16 %v78, %v77
    %v80 = vld [vmem:[%s2] sm:$0xf]
    %v81 = vld [vmem:[%s2 + $0x4] sm:$0xf]
    %v82 = vld [vmem:[%s2 + $0x8] sm:$0xf]
    %v83 = vld [vmem:[%s2 + $0xc] sm:$0xf]
    %v84 = vld [vmem:[%s3] sm:$0x1]
    %v86 = vperm.slane %v84, 0
    %v92 = vunpack.c.l.b16 %v80
    %v93 = vunpack.c.l.b16 %v81
    %v94 = vunpack.c.l.b16 %v82
    %v95 = vunpack.c.l.b16 %v83
    %v96 = vpack.c.b16 %v93, %v92
    %v97 = vpack.c.b16 %v95, %v94
    %v101 = vsel %vm28, %v79, 0
    %103 = vmatpush.bf16.msra.mxu0 0
    %104 = vmatpush.bf16.msra.mxu0 0
    %105 = vmatpush.bf16.msra.mxu0 0
    %106 = vmatpush.bf16.msra.mxu0 0
    %107 = vmatpush.bf16.msra.mxu0 0
    %108 = vmatpush.bf16.msra.mxu0 0
    %109 = vmatpush.bf16.msra.mxu0 %v97
    %110 = vmatpush.bf16.msra.mxu0 %v96
    %111 = vmatmul.bf16.gmra.mxu0 %v101
    %v112 = vpop.f32.mrf.mxu0
    %v113 = vadd.f32 %v86, %v112
    %v114 = vpop.f32.mrf.mxu0
    %v115 = vadd.f32 %v86, %v114
    %116 = vdwg.mxu0
    %v117 = vxor.u32 %v113, 2147483648
    %v118 = vxor.u32 %v115, 2147483648
    %v119 = vmul.f32 %v117, 1.442695
    %v120 = vpow.pop %v119
    %v121 = vmul.f32 %v118, 1.442695
    %v122 = vpow.pop %v121
    %v123 = vadd.f32 %v120, 1.0
    %v124 = vadd.f32 %v122, 1.0
    %v125 = vrcp.pop %v123
    %v126 = vmul.f32 %v123, %v125
    %v127 = vsub.f32 1.0, %v126
    %v128 = vmul.f32 %v125, %v127
    %v129 = vadd.f32 %v125, %v128
    %vm130 = vweird.f32 %v123
    %vm131 = vweird.f32 %v125
    %vm132 = vmor %vm130, %vm131
    %v133 = vsel %vm132, %v125, %v129
    %v134 = vand.u32 2147483647, %v123
    %vm135 = vcmp.eq.f32.partialorder %v134, 8.507059e+37
    %v136 = vand.u32 %v123, 2147483648
    %v137 = vor.u32 1.1754944e-38, %v136
    %v138 = vsel %vm135, %v137, %v133
    %v139 = vmul.f32 1.0, %v138
    %v140 = vrcp.pop %v124
    %v141 = vmul.f32 %v124, %v140
    %v142 = vsub.f32 1.0, %v141
    %v143 = vmul.f32 %v140, %v142
    %v144 = vadd.f32 %v140, %v143
    %vm145 = vweird.f32 %v124
    %vm146 = vweird.f32 %v140
    %vm147 = vmor %vm145, %vm146
    %v148 = vsel %vm147, %v140, %v144
    %v149 = vand.u32 2147483647, %v124
    %vm150 = vcmp.eq.f32.partialorder %v149, 8.507059e+37
    %v151 = vand.u32 %v124, 2147483648
    %v152 = vor.u32 1.1754944e-38, %v151
    %v153 = vsel %vm150, %v152, %v148
    %v154 = vmul.f32 1.0, %v153
    %v155 = vmul.f32 %v113, %v139
    %v156 = vmul.f32 %v115, %v154
    %v157 = vpack.c.bf16 %v156, %v155
    %v158 = vld [vmem:[%s4] sm:$0xf]
    %v159 = vld [vmem:[%s4 + $0x4] sm:$0xf]
    %v160 = vld [vmem:[%s4 + $0x8] sm:$0xf]
    %v161 = vld [vmem:[%s4 + $0xc] sm:$0xf]
    %v162 = vld [vmem:[%s4 + $0x10] sm:$0xf]
    %v163 = vld [vmem:[%s4 + $0x14] sm:$0xf]
    %v164 = vld [vmem:[%s4 + $0x18] sm:$0xf]
    %v165 = vld [vmem:[%s4 + $0x1c] sm:$0xf]
    %v166 = vld [vmem:[%s4 + $0x20] sm:$0xf]
    %v167 = vld [vmem:[%s4 + $0x24] sm:$0xf]
    %v168 = vld [vmem:[%s4 + $0x28] sm:$0xf]
    %v169 = vld [vmem:[%s4 + $0x2c] sm:$0xf]
    %v170 = vld [vmem:[%s4 + $0x30] sm:$0xf]
    %v171 = vld [vmem:[%s4 + $0x34] sm:$0xf]
    %v172 = vld [vmem:[%s4 + $0x38] sm:$0xf]
    %v173 = vld [vmem:[%s4 + $0x3c] sm:$0xf]
    %v174 = vperm.slane %v24, 3
    %v191 = vunpack.c.l.b16 %v158
    %v192 = vunpack.c.l.b16 %v159
    %v193 = vunpack.c.l.b16 %v160
    %v194 = vunpack.c.l.b16 %v161
    %v195 = vunpack.c.l.b16 %v162
    %v196 = vunpack.c.l.b16 %v163
    %v197 = vunpack.c.l.b16 %v164
    %v198 = vunpack.c.l.b16 %v165
    %v199 = vunpack.c.l.b16 %v166
    %v200 = vunpack.c.l.b16 %v167
    %v201 = vunpack.c.l.b16 %v168
    %v202 = vunpack.c.l.b16 %v169
    %v203 = vunpack.c.l.b16 %v170
    %v204 = vunpack.c.l.b16 %v171
    %v205 = vunpack.c.l.b16 %v172
    %v206 = vunpack.c.l.b16 %v173
    %v207 = vpack.c.b16 %v192, %v191
    %v208 = vpack.c.b16 %v194, %v193
    %v209 = vpack.c.b16 %v196, %v195
    %v210 = vpack.c.b16 %v198, %v197
    %v211 = vpack.c.b16 %v200, %v199
    %v212 = vpack.c.b16 %v202, %v201
    %v213 = vpack.c.b16 %v204, %v203
    %v214 = vpack.c.b16 %v206, %v205
    %223 = vmatpush.bf16.msra.mxu0 %v214
    %224 = vmatpush.bf16.msra.mxu0 %v213
    %225 = vmatpush.bf16.msra.mxu0 %v212
    %226 = vmatpush.bf16.msra.mxu0 %v211
    %227 = vmatpush.bf16.msra.mxu0 %v210
    %228 = vmatpush.bf16.msra.mxu0 %v209
    %229 = vmatpush.bf16.msra.mxu0 %v208
    %230 = vmatpush.bf16.msra.mxu0 %v207
    %231 = vmatmul.bf16.gmra.mxu0 %v157
    %v232 = vpop.f32.mrf.mxu0
    %v233 = vadd.f32 %v174, %v232
    %v234 = vpop.f32.mrf.mxu0
    %v235 = vadd.f32 %v174, %v234
    %236 = vdwg.mxu0
    %v237 = vmul.f32 %v77, 2.0
    %v238 = vmul.f32 %v78, 2.0
    %v239 = vadd.f32 %v237, %v233
    %v240 = vadd.f32 %v238, %v235
    %v241 = vsel %vm28, %v239, 0.0
    %242 = vadd.xlane.f32.xlu0 %v241
    %v243 = vpop.xlane.xlu0 %242
    %v244 = vsel %vm28, %v240, 0.0
    %245 = vadd.xlane.f32.xlu0 %v244
    %v246 = vpop.xlane.xlu0 %245
    %v247 = vmul.f32 %v243, 0.03125
    %v248 = vmul.f32 %v246, 0.03125
    %v249 = vsub.f32 %v239, %v247
    %v250 = vsub.f32 %v240, %v248
    %v251 = vmul.f32 %v249, %v249
    %v252 = vmul.f32 %v250, %v250
    %v253 = vsel %vm28, %v251, 0.0
    %254 = vadd.xlane.f32.xlu0 %v253
    %v255 = vpop.xlane.xlu0 %254
    %v256 = vsel %vm28, %v252, 0.0
    %257 = vadd.xlane.f32.xlu0 %v256
    %v258 = vpop.xlane.xlu0 %257
    %v259 = vmul.f32 %v255, 0.03125
    %v260 = vmul.f32 %v258, 0.03125
    %v261 = vadd.f32 %v259, 1e-05
    %v262 = vadd.f32 %v260, 1e-05
    %v263 = vrsqrt.pop %v261
    %v264 = vmul.f32 %v263, %v261
    %v265 = vmul.f32 %v264, %v263
    %v266 = vmul.f32 0.5, %v265
    %v267 = vsub.f32 1.5, %v266
    %v268 = vmul.f32 %v263, %v267
    %vm269 = vweird.f32 %v261
    %vm270 = vweird.f32 %v263
    %vm271 = vmor %vm269, %vm270
    %v272 = vsel %vm271, %v263, %v268
    %v273 = vrsqrt.pop %v262
    %v274 = vmul.f32 %v273, %v262
    %v275 = vmul.f32 %v274, %v273
    %v276 = vmul.f32 0.5, %v275
    %v277 = vsub.f32 1.5, %v276
    %v278 = vmul.f32 %v273, %v277
    %vm279 = vweird.f32 %v262
    %vm280 = vweird.f32 %v273
    %vm281 = vmor %vm279, %vm280
    %v282 = vsel %vm281, %v273, %v278
    %v283 = vmul.f32 %v249, %v272
    %v284 = vmul.f32 %v250, %v282
    %v285 = vperm.slane %v24, 4
    %v286 = vmul.f32 %v283, %v285
    %v287 = vmul.f32 %v284, %v285
    %v288 = vperm.slane %v24, 5
    %v289 = vadd.f32 %v286, %v288
    %v290 = vadd.f32 %v287, %v288
    %291 = vst.msk [vmem:[#allocation2] sm:$0xff] %vm28, %v289
    %292 = vst.msk [vmem:[#allocation2 + $0x8] sm:$0xff] %vm28, %v290
    // Predicated region
    $region22: #{mlp_encoder_layer.1} parent=1 // pred_check
      _
    $region23: #{mlp_encoder_layer.1} parent=1 // pred_check_branch
      %294 = sbr.rel (0) target = $region25
    $region24: #{mlp_encoder_layer.1} parent=1 // pred_region
      %296 = vsyncadd [#allocation3], 0
      %s297 = sshll.u32 [#allocation2], 4
      %s298 = int_to_ptr.vmem [resolvable:$true] %s297
      %s299 = sshll.u32 %s5, 4
      %s300 = int_to_ptr.hbm [resolvable:$true] %s299
      %305 = dma.vmem_to_hbm [thread:$0]  %s298, 256, %s300, [#allocation3], 128, 128, 8
    $region25: #{mlp_encoder_layer.1} parent=1 // pred_fallthru
      _
    // Predicated region
    $region26: #{mlp_encoder_layer.1} parent=1 // pred_check
      _
    $region27: #{mlp_encoder_layer.1} parent=1 // pred_check_branch
      %307 = sbr.rel (0) target = $region29
    $region28: #{mlp_encoder_layer.1} parent=1 // pred_region
      %309 = dma.done [#allocation3], 256
    $region29: #{mlp_encoder_layer.1} parent=1 // pred_fallthru
      _
    %310 = vsyncpa [#allocation3], 1

</llo_original>
